<compile_context>
chip_gen: v5e
topology: v5e:2x2
jax: 0.10.0
libtpu: 0.0.40
codegen_flags: <defaults>
</compile_context>

<pallas_src>
import jax
import jax.numpy as jnp
from jax.experimental import pallas as pl
from jax.experimental.pallas import tpu as pltpu

_LANES = 128                 # vreg lane width
_DEFAULT_TILE_ROWS = 4096    # 4096 * 128 * 4 B = 2 MiB per f32 buffer
_KERNEL_MIN_BATCH = 1 << 16  # below this, the fused plain-JAX FMA wins


def _sublane_multiple(dtype):
    # f32 -> 8, bf16 -> 16, int8/fp8 -> 32 (sub-32-bit packs along sublanes).
    return max(8, 32 // jnp.dtype(dtype).itemsize)


def linear_kernel(w_ref, b_ref, x_ref, o_ref):
    # w_ref: (1,) f32 in SMEM (scalar-prefetched), b_ref: (1,) f32 in SMEM,
    # x_ref / o_ref: (tr, 128) lane-dense tiles in VMEM.
    w = w_ref[0]
    b = b_ref[0]
    y = x_ref[...].astype(jnp.float32) * w + b
    o_ref[...] = y.astype(o_ref.dtype)


def linear_forward(x, weight, bias, *, tile_rows=_DEFAULT_TILE_ROWS,
                   min_kernel_batch=_KERNEL_MIN_BATCH):
    """Pallas equivalent of Model.forward: y = Linear(1, 1)(x), x shape (B, 1)."""
    B, F = x.shape
    assert F == 1 and weight.shape == (1, 1) and bias.shape == (1,)

    # Plain-JAX path: tiny batches (kernel launch + per-step overhead would
    # dominate) and ragged batches (B % 128 != 0 would need a pad copy plus an
    # output slice copy -- ~3x the HBM traffic of this streaming kernel).
    if B < min_kernel_batch or B % _LANES != 0:
        return x * weight[0, 0] + bias[0]

    # Copy-free lane-dense repack: (B, 1) -> (rows, 128) is a pure reshape.
    rows = B // _LANES
    sub = _sublane_multiple(x.dtype)
    if rows <= tile_rows:
        tr = rows                               # single full-array block
    else:
        tr = max(sub, (tile_rows // sub) * sub)  # dtype-aware sublane multiple
    grid = (pl.cdiv(rows, tr),)  # ragged final block handled by Pallas masking

    x2d = jnp.reshape(x, (rows, _LANES))
    w_flat = weight.reshape((1,)).astype(jnp.float32)
    b_flat = bias.reshape((1,)).astype(jnp.float32)

    # in + out tiles, double-buffered. Bump the scoped VMEM limit only when a
    # user-supplied tile pushes past ~12 MiB (v5e's scoped default is 16 MiB).
    tile_bytes = tr * _LANES * jnp.dtype(x.dtype).itemsize
    footprint = 2 * 2 * tile_bytes
    cp_kwargs = dict(dimension_semantics=("parallel",))
    if footprint > 12 * 1024 * 1024:
        cp_kwargs["vmem_limit_bytes"] = footprint + (4 << 20)

    y2d = pl.pallas_call(
        linear_kernel,
        out_shape=jax.ShapeDtypeStruct((rows, _LANES), x.dtype),
        grid_spec=pltpu.PrefetchScalarGridSpec(
            num_scalar_prefetch=2,  # weight, bias -> SMEM once, before the grid
            grid=grid,
            in_specs=[pl.BlockSpec((tr, _LANES), lambda i, w, b: (i, 0))],
            out_specs=pl.BlockSpec((tr, _LANES), lambda i, w, b: (i, 0)),
        ),
        compiler_params=pltpu.CompilerParams(**cp_kwargs),
    )(w_flat, b_flat, x2d)

    return y2d.reshape(B, 1)


if __name__ == "__main__":
    key = jax.random.PRNGKey(0)
    k_w, k_b, k_x1, k_x2 = jax.random.split(key, 4)

    # Deterministic parameter init mirroring nn.Linear(1, 1):
    # uniform(-1/sqrt(fan_in), 1/sqrt(fan_in)) with fan_in = 1.
    weight = jax.random.uniform(k_w, (1, 1), jnp.float32, minval=-1.0, maxval=1.0)
    bias = jax.random.uniform(k_b, (1,), jnp.float32, minval=-1.0, maxval=1.0)

    # (1) The module's actual usage: hour_var = [[4.0]] -> tiny batch, takes
    #     the plain-JAX fast path (kernel would be pure launch overhead).
    hour_var = jnp.array([[4.0]], dtype=jnp.float32)
    y_small = linear_forward(hour_var, weight, bias)

    # (2) Multi-step tiled grid with a ragged final block:
    #     B = 2560 -> 20 rows of 128 lanes, tile_rows=8 -> grid=(3,), final
    #     block has only 4 valid rows (exercises the masked boundary store).
    B1 = 2560
    x1 = jax.random.normal(k_x1, (B1, 1), jnp.float32)
    y1 = linear_forward(x1, weight, bias, tile_rows=8, min_kernel_batch=1)

    # (3) Single full-array block (rows < tile_rows): B = 256 -> (2, 128).
    B2 = 256
    x2 = jax.random.normal(k_x2, (B2, 1), jnp.float32)
    y2 = linear_forward(x2, weight, bias, min_kernel_batch=1)

    jax.block_until_ready((y_small, y1, y2))

    # Correctness check against plain-JAX reference of the PyTorch forward.
    assert jnp.allclose(y_small, hour_var @ weight.T + bias, atol=1e-6)
    assert jnp.allclose(y1, x1 @ weight.T + bias, atol=1e-6)
    assert jnp.allclose(y2, x2 @ weight.T + bias, atol=1e-6)

    print("KERNEL_OK")
</pallas_src>

<mosaic_0001>
module attributes {stable_mosaic.version = 11 : i64} {
  func.func @linear_kernel(%arg0: i32, %arg1: memref<1xf32, #tpu.memory_space<smem>>, %arg2: memref<1xf32, #tpu.memory_space<smem>>, %arg3: memref<8x128xf32, #tpu.memory_space<vmem>>, %arg4: memref<8x128xf32, #tpu.memory_space<vmem>>) attributes {dimension_semantics = [#tpu.dimension_semantics<parallel>], iteration_bounds = array<i64: 3>, scalar_prefetch = 2 : i64, scratch_operands = 0 : i64, tpu.core_type = #tpu.core_type<tc>, window_params = [{transform_indices = @transform_0, window_bounds = array<i64: 8, 128>}, {transform_indices = @transform_1, window_bounds = array<i64: 8, 128>}]} {
    %c0 = arith.constant 0 : index
    %0 = memref.load %arg1[%c0] : memref<1xf32, #tpu.memory_space<smem>>
    %c0_0 = arith.constant 0 : index
    %1 = memref.load %arg2[%c0_0] : memref<1xf32, #tpu.memory_space<smem>>
    %c0_1 = arith.constant 0 : index
    %c0_2 = arith.constant 0 : index
    %2 = vector.load %arg3[%c0_1, %c0_2] : memref<8x128xf32, #tpu.memory_space<vmem>>, vector<8x128xf32>
    %3 = vector.broadcast %0 : f32 to vector<8x128xf32>
    %4 = arith.mulf %2, %3 : vector<8x128xf32>
    %5 = vector.broadcast %1 : f32 to vector<8x128xf32>
    %6 = arith.addf %4, %5 : vector<8x128xf32>
    %c0_3 = arith.constant 0 : index
    %c0_4 = arith.constant 0 : index
    %7 = vector.load %arg4[%c0_3, %c0_4] : memref<8x128xf32, #tpu.memory_space<vmem>>, vector<8x128xf32>
    tpu.vector_store %arg4[%c0_3, %c0_4], %6 {strides = array<i32>} : memref<8x128xf32, #tpu.memory_space<vmem>>, vector<8x128xf32>,
    return
  }
  func.func @transform_0(%arg0: i32, %arg1: memref<1xf32, #tpu.memory_space<smem>>, %arg2: memref<1xf32, #tpu.memory_space<smem>>) -> (i32, i32) {
    %c0_i32 = arith.constant 0 : i32
    %c0_i32_0 = arith.constant 0 : i32
    return %arg0, %c0_i32 : i32, i32
  }
  func.func @transform_1(%arg0: i32, %arg1: memref<1xf32, #tpu.memory_space<smem>>, %arg2: memref<1xf32, #tpu.memory_space<smem>>) -> (i32, i32) {
    %c0_i32 = arith.constant 0 : i32
    %c0_i32_0 = arith.constant 0 : i32
    return %arg0, %c0_i32 : i32, i32
  }
}

</mosaic_0001>

<llo_original>
// kernel: tpu_custom_call.1
$region0: #{tpu_custom_call.1}
  #allocation0 [shape = 'u32[]', space=smem, size = 0x4, offset = 0x4, fixed_abs, tag = 'smem constant byte address 0x4 - core index']
  #allocation1 [shape = 'u32[72,128]{1,0:T(1,128)}', space=vmem, size = 0x9000, scoped, tag = 'internal scratch']
  #allocation2 [shape = 's32[1]{0}', space=sflag, size = 0x4, scoped, tag = 'scoped memory for tpu_custom_call.1']
  #allocation3 [shape = 'f32[1]{0:T(128)S(6)}', space=smem, size = 0x200, scoped, tag = 'prefetched SMEM operand 0']
  #allocation4 [shape = 'f32[1]{0:T(128)S(6)}', space=smem, size = 0x200, scoped, tag = 'prefetched SMEM operand 1']
  %s0 = inlined_call_operand.<no memory space> [shape: f32[1], index: 0, kind: input, shape index: {}]
  %s1 = inlined_call_operand.<no memory space> [shape: f32[1], index: 1, kind: input, shape index: {}]
  %s2 = inlined_call_operand.hbm [shape: f32[20,128], index: 2, kind: input, shape index: {}]
  %s3 = inlined_call_operand.hbm [shape: f32[20,128], index: 3, kind: output, shape index: {}]
  %s4 = sld [smem:[#allocation0]]
  $region41: #{tpu_custom_call.1} parent=0
    _
  %s6 = ssub.s32 1, %s4
  %s7 = scalar_select 0, %s6, %s4
  %8 = sst [smem:[#allocation3]] %s0
  %9 = sst [smem:[#allocation4]] %s1
  $region1: #{tpu_custom_call.1} parent=0
    #allocation5 [shape = 'u8[8192]{0}', space=vmem, size = 0x2000, scoped, tag = 'input window, operand 2']
    #allocation6 [shape = 's32[2]{0}', space=sflag, size = 0x8, scoped, tag = 'scoped memory for tpu_custom_call.1']
    #allocation7 [shape = 's32[2]{0}', space=sflag, size = 0x8, scoped, tag = 'scoped memory for tpu_custom_call.1']
    #allocation8 [shape = 'u8[8192]{0}', space=vmem, size = 0x2000, scoped, tag = 'output window, operand 0']
    %10 = vsyncpa [#allocation6], 0
    %s11 = scalar_lea.sflag [#allocation6], 1
    %12 = vsyncpa %s11, 0
    %13 = vsyncpa [#allocation7], 0
    %s14 = scalar_lea.sflag [#allocation7], 1
    %15 = vsyncpa %s14, 0
    loop: start=0, step=1, limit=5
    $region2: #{tpu_custom_call.1} parent=1 // loop_pre_header
      _
    $region3: #{tpu_custom_call.1} parent=1 // loop_header
      %s17 = sphi 0, %s21
      %p18 = scmp.ge.s32.totalorder %s17, 5
      %s27 = sphi 0, %s29
      %s30 = sphi 0, %s27
      %s31 = sphi 0, %s30
      %s47 = sphi 0, %s31
      %s53 = sphi 0, %s55
      %s56 = sphi 0, %s53
      %s57 = sphi 0, %s56
      %s73 = sphi 0, %s57
    $region4: #{tpu_custom_call.1} parent=1 // loop_header_branch
      %20 = sbr.rel (%p18) target = $region8
    $region5: #{tpu_custom_call.1} parent=1 // loop_body
      %s22 = ssub.s32 %s17, 1
      %s23 = ssub.s32 %s17, 2
      %s24 = sadd.s32 %s17, 1
      %s25 = ssub.s32 %s17, %s24
      %p26 = scmp.eq.s32.totalorder %s25, 0
      %s28 = sadd.s32 %s27, 1
      %s29 = scalar_select %p26, %s27, %s28
      %p32 = pneg %p26
      %p33 = scmp.eq.s32.totalorder %s17, 2
      %p34 = por %p32, %p33
      %p35 = scmp.ne.s32.totalorder %s27, %s30
      %p36 = scmp.eq.s32.totalorder %s17, 0
      %p37 = por %p35, %p36
      %p38 = scmp.ne.s32.totalorder %s27, %s30
      %p39 = scmp.eq.s32.totalorder %s22, 2
      %p40 = por %p38, %p39
      %p41 = scmp.ne.s32.totalorder %s30, %s31
      %p42 = scmp.eq.s32.totalorder %s22, 0
      %p43 = por %p41, %p42
      %p44 = scmp.ne.s32.totalorder %s30, %s31
      %p45 = scmp.eq.s32.totalorder %s23, 2
      %p46 = por %p44, %p45
      %p48 = scmp.ne.s32.totalorder %s31, %s47
      %p49 = scmp.eq.s32.totalorder %s23, 0
      %p50 = por %p48, %p49
      %s51 = ssub.s32 %s17, %s24
      %p52 = scmp.eq.s32.totalorder %s51, 0
      %s54 = sadd.s32 %s53, 1
      %s55 = scalar_select %p52, %s53, %s54
      %p58 = pneg %p52
      %p59 = scmp.eq.s32.totalorder %s17, 2
      %p60 = por %p58, %p59
      %p61 = scmp.ne.s32.totalorder %s53, %s56
      %p62 = scmp.eq.s32.totalorder %s17, 0
      %p63 = por %p61, %p62
      %p64 = scmp.ne.s32.totalorder %s53, %s56
      %p65 = scmp.eq.s32.totalorder %s22, 2
      %p66 = por %p64, %p65
      %p67 = scmp.ne.s32.totalorder %s56, %s57
      %p68 = scmp.eq.s32.totalorder %s22, 0
      %p69 = por %p67, %p68
      %p70 = scmp.ne.s32.totalorder %s56, %s57
      %p71 = scmp.eq.s32.totalorder %s23, 2
      %p72 = por %p70, %p71
      %p74 = scmp.ne.s32.totalorder %s57, %s73
      %p75 = scmp.eq.s32.totalorder %s23, 0
      %p76 = por %p74, %p75
      %p77 = scmp.le.s32.totalorder 1, %s17
      %p78 = scmp.lt.s32.totalorder %s17, 4
      %p79 = pnand %p77, %p78
      %p80 = pneg %p79
      // Predicated region
      $region9: #{tpu_custom_call.1} parent=5 // pred_check
        _
      $region10: #{tpu_custom_call.1} parent=5 // pred_check_branch
        %82 = sbr.rel (%p79) target = $region12
      $region11: #{tpu_custom_call.1} parent=5 // pred_region
        %s83 = ssub.s32 %s17, 1
      $region12: #{tpu_custom_call.1} parent=5 // pred_fallthru
        _
      %p84 = scmp.lt.s32.totalorder %s17, 3
      // Predicated region
      $region13: #{tpu_custom_call.1} parent=5 // pred_check
        %p85 = pneg %p84
      $region14: #{tpu_custom_call.1} parent=5 // pred_check_branch
        %87 = sbr.rel (%p85) target = $region16
      $region15: #{tpu_custom_call.1} parent=5 // pred_region
        // Predicated region
        $region17: #{tpu_custom_call.1} parent=15 // pred_check
          %p88 = pneg %p37
        $region18: #{tpu_custom_call.1} parent=15 // pred_check_branch
          %90 = sbr.rel (%p88) target = $region20
        $region19: #{tpu_custom_call.1} parent=15 // pred_region
          %s91 = sand.u32 %s27, 1
          %s92 = scalar_lea.sflag [#allocation6], %s91
          %s93 = sand.u32 %s27, 1
          %s94 = smul.addr %s93, 8
          %s95 = scalar_lea.vmem [#allocation5], %s94
          %97 = vsyncadd %s92, 0
          %s98 = smul.addr %s17, 8
          %s99 = scalar_lea.hbm %s2, %s98
          %s101 = sshll.u32 %s99, 4
          %s102 = int_to_ptr.hbm [resolvable:$true] %s101
          %s103 = sshll.u32 %s95, 4
          %s104 = int_to_ptr.vmem [resolvable:$true] %s103
          %106 = dma.hbm_to_vmem [thread:$0]  %s102, 128, %s104, %s92
        $region20: #{tpu_custom_call.1} parent=15 // pred_fallthru
          _
      $region16: #{tpu_custom_call.1} parent=5 // pred_fallthru
        _
      %p107 = scmp.le.s32.totalorder 1, %s17
      %p108 = scmp.lt.s32.totalorder %s17, 4
      %p109 = pnand %p107, %p108
      %p110 = pneg %p109
      // Predicated region
      $region21: #{tpu_custom_call.1} parent=5 // pred_check
        _
      $region22: #{tpu_custom_call.1} parent=5 // pred_check_branch
        %112 = sbr.rel (%p109) target = $region24
      $region23: #{tpu_custom_call.1} parent=5 // pred_region
        %s113 = ssub.s32 %s17, 1
        %s114 = sand.u32 %s30, 1
        %s115 = scalar_lea.sflag [#allocation6], %s114
        %s116 = sand.u32 %s30, 1
        %s117 = smul.addr %s116, 8
        %s118 = scalar_lea.vmem [#allocation5], %s117
        // Predicated region
        $region25: #{tpu_custom_call.1} parent=23 // pred_check
          %p119 = pneg %p43
        $region26: #{tpu_custom_call.1} parent=23 // pred_check_branch
          %121 = sbr.rel (%p119) target = $region28
        $region27: #{tpu_custom_call.1} parent=23 // pred_region
          %123 = dma.done %s115, 128
        $region28: #{tpu_custom_call.1} parent=23 // pred_fallthru
          _
        %s124 = sand.u32 %s30, 1
        %s125 = scalar_lea.sflag [#allocation6], %s124
        %s126 = sand.u32 %s30, 1
        %s127 = smul.addr %s126, 8
        %s128 = scalar_lea.vmem [#allocation5], %s127
        %p129 = pneg %p43
        %p130 = pneg %p40
        %p131 = pneg %p69
        %p132 = pneg %p66
        %s133 = sand.u32 %s56, 1
        %s134 = scalar_lea.sflag [#allocation7], %s133
        %s135 = sand.u32 %s56, 1
        %s136 = smul.addr %s135, 8
        %s137 = scalar_lea.vmem [#allocation8], %s136
        %s138 = sld [smem:[#allocation3]]
        %s139 = sld [smem:[#allocation4]]
        %v140 = vld [vmem:[%s118] sm:$0xff]
        %v141 = vstv %s138
        %v142 = vmul.f32 %v140, %v141
        %v143 = vstv %s139
        %v144 = vadd.f32 %v142, %v143
        %145 = vst [vmem:[%s137] sm:$0xff] %v144
        %s146 = sand.u32 %s56, 1
        %s147 = scalar_lea.sflag [#allocation7], %s146
        %s148 = sand.u32 %s56, 1
        %s149 = smul.addr %s148, 8
        %s150 = scalar_lea.vmem [#allocation8], %s149
        // Predicated region
        $region29: #{tpu_custom_call.1} parent=23 // pred_check
          %p151 = pneg %p66
        $region30: #{tpu_custom_call.1} parent=23 // pred_check_branch
          %153 = sbr.rel (%p151) target = $region32
        $region31: #{tpu_custom_call.1} parent=23 // pred_region
          %155 = vsyncadd %s147, 0
          %s156 = smul.addr %s22, 8
          %s157 = scalar_lea.hbm %s3, %s156
          %s159 = sshll.u32 %s150, 4
          %s160 = int_to_ptr.vmem [resolvable:$true] %s159
          %s161 = sshll.u32 %s157, 4
          %s162 = int_to_ptr.hbm [resolvable:$true] %s161
          %164 = dma.vmem_to_hbm [thread:$0]  %s160, 128, %s162, %s147
        $region32: #{tpu_custom_call.1} parent=23 // pred_fallthru
          _
      $region24: #{tpu_custom_call.1} parent=5 // pred_fallthru
        _
      %p165 = scmp.le.s32.totalorder 2, %s17
      // Predicated region
      $region33: #{tpu_custom_call.1} parent=5 // pred_check
        %p166 = pneg %p165
      $region34: #{tpu_custom_call.1} parent=5 // pred_check_branch
        %168 = sbr.rel (%p166) target = $region36
      $region35: #{tpu_custom_call.1} parent=5 // pred_region
        %s169 = ssub.s32 %s17, 2
        // Predicated region
        $region37: #{tpu_custom_call.1} parent=35 // pred_check
          %p170 = pneg %p72
        $region38: #{tpu_custom_call.1} parent=35 // pred_check_branch
          %172 = sbr.rel (%p170) target = $region40
        $region39: #{tpu_custom_call.1} parent=35 // pred_region
          %s173 = sand.u32 %s57, 1
          %s174 = scalar_lea.sflag [#allocation7], %s173
          %s175 = sand.u32 %s57, 1
          %s176 = smul.addr %s175, 8
          %s177 = scalar_lea.vmem [#allocation8], %s176
          %179 = dma.done %s174, 128
        $region40: #{tpu_custom_call.1} parent=35 // pred_fallthru
          _
      $region36: #{tpu_custom_call.1} parent=5 // pred_fallthru
        _
    $region6: #{tpu_custom_call.1} parent=1 // loop_footer
      %s21 = sadd.s32 1, %s17
    $region7: #{tpu_custom_call.1} parent=1 // loop_footer_branch
      %16 = sbr.rel target = $region3
    $region8: #{tpu_custom_call.1} parent=1 // loop_exit
      _
    %180 = vsyncpa [#allocation6], 1
    %s181 = scalar_lea.sflag [#allocation6], 1
    %182 = vsyncpa %s181, 1
    %183 = vsyncpa [#allocation7], 1
    %s184 = scalar_lea.sflag [#allocation7], 1
    %185 = vsyncpa %s184, 1

</llo_original>
